<compile_context>
chip_gen: v6e
topology: v6e:2x2x1
jax: 0.10.0
libtpu: 0.0.40
codegen_flags: <defaults>
</compile_context>

<pallas_src>
import math
from functools import partial

import jax
import jax.numpy as jnp
from jax.experimental import pallas as pl
from jax.experimental.pallas import tpu as pltpu

MERGE_SIZE = 2


def _round_up(x, m):
    return ((x + m - 1) // m) * m


# ---------------------------------------------------------------------------
# Reference-path helpers (mirror the PyTorch code; used for verification).
# ---------------------------------------------------------------------------
def window2image(x):
    """(bs, nW, P, D) -> (bs, D, H, W), matching the PyTorch helper exactly."""
    bs, num_window, num_patch_in_window, depth = x.shape
    ws = int(math.sqrt(num_patch_in_window))
    nw_side = int(math.sqrt(num_window))
    h = nw_side * ws
    w = h
    x = x.reshape(bs, nw_side, nw_side, ws, ws, depth)
    x = jnp.swapaxes(x, 2, 3)                      # torch .transpose(2, 3)
    img = x.reshape(bs, h * w, depth)
    img = jnp.swapaxes(img, -1, -2).reshape(bs, depth, h, w)
    return img


def unfold_2x2(img, m):
    """F.unfold(kernel=(m,m), stride=(m,m)).transpose(-1,-2)."""
    bs, d, h, w = img.shape
    oh, ow = h // m, w // m
    x = img.reshape(bs, d, oh, m, ow, m)           # (bs, D, oi, ki, oj, kj)
    x = x.transpose(0, 1, 3, 5, 2, 4)              # (bs, D, ki, kj, oi, oj)
    x = x.reshape(bs, d * m * m, oh * ow)          # (bs, D*m*m, L)
    return jnp.swapaxes(x, -1, -2)                 # (bs, L, D*m*m)


# ---------------------------------------------------------------------------
# Combined permutation used in the actual forward (== unfold(window2image(x))).
# ---------------------------------------------------------------------------
def extract_merged_patches(x, m):
    """(bs, nW, P, D) -> (bs, L, D*m*m) with F.unfold channel ordering."""
    bs, num_window, num_patch_in_window, depth = x.shape
    nw = int(math.sqrt(num_window))
    ws = int(math.sqrt(num_patch_in_window))
    assert nw * nw == num_window, "num_window must be a perfect square"
    assert ws * ws == num_patch_in_window, "num_patch_in_window must be a perfect square"
    assert ws % m == 0, "window_size must be divisible by merge_size"
    t = x.reshape(bs, nw, nw, ws // m, m, ws // m, m, depth)
    # axes: (b, wi, wj, a, ki, c, kj, d) -> (b, wi, a, wj, c, d, ki, kj)
    t = t.transpose(0, 1, 3, 2, 5, 7, 4, 6)
    out_side = nw * (ws // m)
    return t.reshape(bs, out_side * out_side, depth * m * m)


# ---------------------------------------------------------------------------
# Pallas kernel: row-tiled linear projection  y = x @ w + b
# ---------------------------------------------------------------------------
def _proj_kernel(x_ref, w_ref, b_ref, o_ref):
    # x_ref: (TM, K) bf16, w_ref: (K, Npad) bf16, b_ref: (1, Npad) f32,
    # o_ref: (TM, Npad) out_dtype
    acc = jnp.dot(x_ref[...], w_ref[...], preferred_element_type=jnp.float32)
    o_ref[...] = (acc + b_ref[...]).astype(o_ref.dtype)


# ---------------------------------------------------------------------------
# VMEM budgeting / row-tile selection
# ---------------------------------------------------------------------------
def _vmem_budget_bytes():
    try:
        phys = pltpu.get_tpu_info().vmem_capacity_bytes
    except Exception:
        phys = 64 * 1024 * 1024          # conservative: v7x per-TensorCore VMEM
    return int(phys * 3 // 4)            # 48 MiB on v7x, 96 MiB on v5e/v6e


def _pick_row_tile(M, K, n_pad, out_itemsize, vmem_budget, max_row_tile, weight_bufs):
    """Largest tm (multiple of 16, <= max_row_tile) that fits the VMEM budget,
    preferring a divisor of M (no padding / no post-kernel row slice) and
    >= 2 grid steps (v7x has 2 TensorCores)."""
    resident = weight_bufs * K * n_pad * 2 + 2 * n_pad * 4   # bf16 weight + f32 bias
    per_row = 2 * K * 2 + 2 * n_pad * out_itemsize           # dbl-buffered x row + out row
    cap = (vmem_budget - resident) // max(per_row, 1)
    cap = max(16, min(int(cap), max_row_tile))
    cap = max(16, (cap // 16) * 16)
    if M % 16 == 0:
        tm = 16
        for t in range(cap, 15, -16):
            if M % t == 0:
                tm = t
                break
        if tm == M and M > 16:           # keep >= 2 grid steps when possible
            start = (min(cap, M // 2) // 16) * 16
            for t in range(start, 15, -16):
                if M % t == 0:
                    tm = t
                    break
        return tm, M
    tm = min(cap, _round_up(M, 16))
    return tm, _round_up(M, tm)


# ---------------------------------------------------------------------------
# Forward
# ---------------------------------------------------------------------------
@partial(jax.jit, static_argnames=("merge_size", "compute_dtype", "out_dtype",
                                   "max_row_tile", "vmem_budget", "fast"))
def _patch_merging_impl(x, weight, bias, *, merge_size, compute_dtype, out_dtype,
                        max_row_tile, vmem_budget, fast):
    bs = x.shape[0]
    # Cast to bf16 BEFORE the permutation: the unfold/transpose is a pure
    # HBM-bandwidth pass, so moving 2-byte elements halves it.
    merged = extract_merged_patches(x.astype(compute_dtype), merge_size)  # (bs,L,K)
    _, L, K = merged.shape
    N = weight.shape[0]

    # Collapse batch and L into one row axis -> a single 2-D matmul.
    M = bs * L
    x2d = merged.reshape(M, K)

    n_pad = _round_up(N, 128)                    # lane-dense, unmasked stores
    out_itemsize = jnp.dtype(out_dtype).itemsize
    weight_bufs = 1 if fast else 2
    tm, m_pad = _pick_row_tile(M, K, n_pad, out_itemsize, vmem_budget,
                               max_row_tile, weight_bufs)

    w_t = weight.T.astype(compute_dtype)         # (K, N)
    b_p = bias
    if n_pad != N:
        w_t = jnp.pad(w_t, ((0, 0), (0, n_pad - N)))
        b_p = jnp.pad(bias, (0, n_pad - N))
    b2 = b_p.reshape(1, n_pad).astype(jnp.float32)

    if m_pad != M:
        x2d = jnp.pad(x2d, ((0, m_pad - M), (0, 0)))

    grid = (m_pad // tm,)
    cdtype_size = jnp.dtype(compute_dtype).itemsize
    cost = pl.CostEstimate(
        flops=2 * m_pad * K * n_pad,
        transcendentals=0,
        bytes_accessed=(m_pad * K * cdtype_size          # activation read
                        + K * n_pad * cdtype_size        # weight read
                        + n_pad * 4                      # bias read
                        + m_pad * n_pad * out_itemsize), # output write
    )

    if fast:
        # Grid-invariant operands: single resident VMEM buffer; let XLA fuse
        # the activation permutation/cast straight into the input DMA.
        w_spec = pl.BlockSpec((K, n_pad), lambda i: (0, 0),
                              pipeline_mode=pl.Buffered(1))
        b_spec = pl.BlockSpec((1, n_pad), lambda i: (0, 0),
                              pipeline_mode=pl.Buffered(1))
        allow_fusion = [True, False, False]
    else:
        w_spec = pl.BlockSpec((K, n_pad), lambda i: (0, 0))
        b_spec = pl.BlockSpec((1, n_pad), lambda i: (0, 0))
        allow_fusion = None

    out = pl.pallas_call(
        _proj_kernel,
        out_shape=jax.ShapeDtypeStruct((m_pad, n_pad), out_dtype),
        grid_spec=pltpu.PrefetchScalarGridSpec(
            num_scalar_prefetch=0,
            grid=grid,
            in_specs=[
                pl.BlockSpec((tm, K), lambda i: (i, 0)),   # row tile of x
                w_spec,                                    # resident weight
                b_spec,                                    # resident bias
            ],
            out_specs=pl.BlockSpec((tm, n_pad), lambda i: (i, 0)),
        ),
        compiler_params=pltpu.CompilerParams(
            dimension_semantics=("parallel",),
            vmem_limit_bytes=vmem_budget,
            allow_input_fusion=allow_fusion,
        ),
        cost_estimate=cost,
    )(x2d, w_t, b2)

    # Slice only when padding was actually added (no extra HBM pass when M is
    # tile-aligned and N is already a multiple of 128, as in real Swin dims).
    if m_pad != M or n_pad != N:
        out = out[:M, :N]
    return out.reshape(bs, L, N)


def patch_merging_forward(x, weight, bias, merge_size=MERGE_SIZE,
                          compute_dtype=jnp.bfloat16, out_dtype=jnp.float32,
                          max_row_tile=1024):
    """x: (bs, num_window, num_patch_in_window, patch_depth)
       weight: (out_features, in_features)  -- PyTorch Linear layout
       bias:   (out_features,)
    Pass out_dtype=jnp.bfloat16 if the downstream consumer accepts bf16 to
    halve output HBM writeback."""
    vmem_budget = _vmem_budget_bytes()
    common = dict(merge_size=merge_size, compute_dtype=compute_dtype,
                  out_dtype=out_dtype, max_row_tile=max_row_tile,
                  vmem_budget=vmem_budget)
    try:
        return _patch_merging_impl(x, weight, bias, fast=True, **common)
    except Exception:
        # Safe fallback: default double-buffered operands, no input fusion.
        return _patch_merging_impl(x, weight, bias, fast=False, **common)


if __name__ == "__main__":
    # Small shapes consistent with the module:
    # bs=2, num_window=4 (2x2 windows), num_patch_in_window=16 (window_size=4),
    # patch_depth = model_dim = 8.
    bs, num_window, num_patch_in_window, model_dim = 2, 4, 16, 8
    in_features = model_dim * MERGE_SIZE * MERGE_SIZE          # 32
    out_features = int(in_features * 0.5)                      # 16

    key = jax.random.PRNGKey(0)
    kx, kw, kb = jax.random.split(key, 3)
    x = jax.random.normal(
        kx, (bs, num_window, num_patch_in_window, model_dim), dtype=jnp.float32
    )
    # Deterministic synthetic parameters (PyTorch Linear layout: (out, in)).
    bound = 1.0 / math.sqrt(in_features)
    weight = jax.random.uniform(
        kw, (out_features, in_features), minval=-bound, maxval=bound,
        dtype=jnp.float32,
    )
    bias = jax.random.uniform(
        kb, (out_features,), minval=-bound, maxval=bound, dtype=jnp.float32
    )

    out = patch_merging_forward(x, weight, bias)
    out = jax.block_until_ready(out)
    assert out.shape == (bs, 16, out_features), out.shape

    # 1) The combined permutation matches the PyTorch-mirroring two-step path.
    merged_ref = unfold_2x2(window2image(x), MERGE_SIZE)
    merged_new = extract_merged_patches(x, MERGE_SIZE)
    assert jnp.array_equal(merged_ref, merged_new), "patch extraction mismatch"

    # 2) Tight check vs an exactly-matched bf16-input / f32-accumulate reference.
    m_b = merged_ref.astype(jnp.bfloat16).astype(jnp.float32)
    w_b = weight.astype(jnp.bfloat16).astype(jnp.float32)
    ref_bf16 = jnp.einsum("blk,nk->bln", m_b, w_b) + bias
    assert jnp.allclose(out, ref_bf16, atol=1e-3, rtol=1e-3), \
        "mismatch vs bf16 reference"

    # 3) Loose check vs the full-f32 forward (documents the bf16 tolerance).
    ref_f32 = jnp.einsum("blk,nk->bln", merged_ref, weight) + bias
    assert jnp.allclose(out, ref_f32, atol=5e-2, rtol=5e-2), \
        "mismatch vs f32 reference"

    print("KERNEL_OK")
</pallas_src>

<mosaic_0001>
module attributes {stable_mosaic.version = 11 : i64} {
  func.func @_proj_kernel(%arg0: i32, %arg1: memref<16x32xbf16, #tpu.memory_space<vmem>>, %arg2: memref<32x128xbf16, #tpu.memory_space<vmem>>, %arg3: memref<1x128xf32, #tpu.memory_space<vmem>>, %arg4: memref<16x128xf32, #tpu.memory_space<vmem>>) attributes {dimension_semantics = [#tpu.dimension_semantics<parallel>], iteration_bounds = array<i64: 2>, scalar_prefetch = 0 : i64, scratch_operands = 0 : i64, tpu.core_type = #tpu.core_type<tc>, window_params = [{transform_indices = @transform_0, window_bounds = array<i64: 16, 32>}, {pipeline_mode = #tpu.pipeline_mode<synchronous>, transform_indices = @transform_1, window_bounds = array<i64: 32, 128>}, {pipeline_mode = #tpu.pipeline_mode<synchronous>, transform_indices = @transform_2, window_bounds = array<i64: 1, 128>}, {transform_indices = @transform_3, window_bounds = array<i64: 16, 128>}]} {
    %c0 = arith.constant 0 : index
    %c0_0 = arith.constant 0 : index
    %0 = vector.load %arg1[%c0, %c0_0] : memref<16x32xbf16, #tpu.memory_space<vmem>>, vector<16x32xbf16>
    %c0_1 = arith.constant 0 : index
    %c0_2 = arith.constant 0 : index
    %1 = vector.load %arg2[%c0_1, %c0_2] : memref<32x128xbf16, #tpu.memory_space<vmem>>, vector<32x128xbf16>
    %cst = arith.constant dense<0.000000e+00> : vector<16x128xf32>
    %2 = tpu.matmul %0, %1, %cst {dimension_numbers = #tpu.dot_dimension_numbers<[1], [0], [0], [1], [0, 0, 1, 1], [], []>} : vector<16x32xbf16>, vector<32x128xbf16>, vector<16x128xf32> -> vector<16x128xf32>
    %c0_3 = arith.constant 0 : index
    %c0_4 = arith.constant 0 : index
    %3 = vector.load %arg3[%c0_3, %c0_4] : memref<1x128xf32, #tpu.memory_space<vmem>>, vector<1x128xf32>
    %4 = vector.broadcast %3 : vector<1x128xf32> to vector<16x128xf32>
    %5 = arith.addf %2, %4 : vector<16x128xf32>
    %c0_5 = arith.constant 0 : index
    %c0_6 = arith.constant 0 : index
    %6 = vector.load %arg4[%c0_5, %c0_6] : memref<16x128xf32, #tpu.memory_space<vmem>>, vector<16x128xf32>
    tpu.vector_store %arg4[%c0_5, %c0_6], %5 {strides = array<i32>} : memref<16x128xf32, #tpu.memory_space<vmem>>, vector<16x128xf32>,
    return
  }
  func.func @transform_0(%arg0: i32) -> (i32, i32) {
    %c0_i32 = arith.constant 0 : i32
    %c0_i32_0 = arith.constant 0 : i32
    return %arg0, %c0_i32 : i32, i32
  }
  func.func @transform_1(%arg0: i32) -> (i32, i32) {
    %c0_i32 = arith.constant 0 : i32
    %c0_i32_0 = arith.constant 0 : i32
    %c0_i32_1 = arith.constant 0 : i32
    return %c0_i32, %c0_i32_0 : i32, i32
  }
  func.func @transform_2(%arg0: i32) -> (i32, i32) {
    %c0_i32 = arith.constant 0 : i32
    %c0_i32_0 = arith.constant 0 : i32
    %c0_i32_1 = arith.constant 0 : i32
    return %c0_i32, %c0_i32_0 : i32, i32
  }
  func.func @transform_3(%arg0: i32) -> (i32, i32) {
    %c0_i32 = arith.constant 0 : i32
    %c0_i32_0 = arith.constant 0 : i32
    return %arg0, %c0_i32 : i32, i32
  }
}

module attributes {stable_mosaic.version = 11 : i64} {
  func.func @_proj_kernel(%arg0: i32, %arg1: memref<16x32xbf16, #tpu.memory_space<vmem>>, %arg2: memref<32x128xbf16, #tpu.memory_space<vmem>>, %arg3: memref<1x128xf32, #tpu.memory_space<vmem>>, %arg4: memref<16x128xf32, #tpu.memory_space<vmem>>) attributes {dimension_semantics = [#tpu.dimension_semantics<parallel>], iteration_bounds = array<i64: 2>, scalar_prefetch = 0 : i64, scratch_operands = 0 : i64, tpu.core_type = #tpu.core_type<tc>, window_params = [{transform_indices = @transform_0, window_bounds = array<i64: 16, 32>}, {pipeline_mode = #tpu.pipeline_mode<synchronous>, transform_indices = @transform_1, window_bounds = array<i64: 32, 128>}, {pipeline_mode = #tpu.pipeline_mode<synchronous>, transform_indices = @transform_2, window_bounds = array<i64: 1, 128>}, {transform_indices = @transform_3, window_bounds = array<i64: 16, 128>}]} {
    %c0 = arith.constant 0 : index
    %c0_0 = arith.constant 0 : index
    %0 = vector.load %arg1[%c0, %c0_0] : memref<16x32xbf16, #tpu.memory_space<vmem>>, vector<16x32xbf16>
    %c0_1 = arith.constant 0 : index
    %c0_2 = arith.constant 0 : index
    %1 = vector.load %arg2[%c0_1, %c0_2] : memref<32x128xbf16, #tpu.memory_space<vmem>>, vector<32x128xbf16>
    %cst = arith.constant dense<0.000000e+00> : vector<16x128xf32>
    %2 = tpu.matmul %0, %1, %cst {dimension_numbers = #tpu.dot_dimension_numbers<[1], [0], [0], [1], [0, 0, 1, 1], [], []>} : vector<16x32xbf16>, vector<32x128xbf16>, vector<16x128xf32> -> vector<16x128xf32>
    %c0_3 = arith.constant 0 : index
    %c0_4 = arith.constant 0 : index
    %3 = vector.load %arg3[%c0_3, %c0_4] : memref<1x128xf32, #tpu.memory_space<vmem>>, vector<1x128xf32>
    %4 = vector.broadcast %3 : vector<1x128xf32> to vector<16x128xf32>
    %5 = arith.addf %2, %4 : vector<16x128xf32>
    %c0_5 = arith.constant 0 : index
    %c0_6 = arith.constant 0 : index
    %6 = vector.load %arg4[%c0_5, %c0_6] : memref<16x128xf32, #tpu.memory_space<vmem>>, vector<16x128xf32>
    tpu.vector_store %arg4[%c0_5, %c0_6], %5 {strides = array<i32>} : memref<16x128xf32, #tpu.memory_space<vmem>>, vector<16x128xf32>,
    return
  }
  func.func @transform_0(%arg0: i32) -> (i32, i32) {
    %c0_i32 = arith.constant 0 : i32
    %c0_i32_0 = arith.constant 0 : i32
    return %arg0, %c0_i32 : i32, i32
  }
  func.func @transform_1(%arg0: i32) -> (i32, i32) {
    %c0_i32 = arith.constant 0 : i32
    %c0_i32_0 = arith.constant 0 : i32
    %c0_i32_1 = arith.constant 0 : i32
    return %c0_i32, %c0_i32_0 : i32, i32
  }
  func.func @transform_2(%arg0: i32) -> (i32, i32) {
    %c0_i32 = arith.constant 0 : i32
    %c0_i32_0 = arith.constant 0 : i32
    %c0_i32_1 = arith.constant 0 : i32
    return %c0_i32, %c0_i32_0 : i32, i32
  }
  func.func @transform_3(%arg0: i32) -> (i32, i32) {
    %c0_i32 = arith.constant 0 : i32
    %c0_i32_0 = arith.constant 0 : i32
    return %arg0, %c0_i32 : i32, i32
  }
}

</mosaic_0001>

<llo_original>
// kernel: _patch_merging_impl.1
$region0: #{_patch_merging_impl.1}
  #allocation0 [shape = 'u32[]', space=smem, size = 0x4, offset = 0x4, fixed_abs, tag = 'smem constant byte address 0x4 - core index']
  #allocation1 [shape = 'u32[144,128]{1,0:T(1,128)}', space=vmem, size = 0x12000, scoped, tag = 'internal scratch']
  %s0 = inlined_call_operand.vmem [shape: bf16[32,32], index: 0, kind: input, shape index: {}]
  %s1 = inlined_call_operand.vmem [shape: bf16[32,128], index: 1, kind: input, shape index: {}]
  %s2 = inlined_call_operand.vmem [shape: f32[1,128], index: 2, kind: input, shape index: {}]
  %s3 = inlined_call_operand.hbm [shape: f32[32,128], index: 3, kind: output, shape index: {}]
  %s4 = sld [smem:[#allocation0]]
  $region45: #{_patch_merging_impl.1} parent=0
    _
  %s6 = ssub.s32 1, %s4
  %s7 = scalar_select 0, %s6, %s4
  $region1: #{_patch_merging_impl.1} parent=0
    #allocation2 [shape = 'u8[16384]{0}', space=vmem, size = 0x4000, scoped, tag = 'output window, operand 0']
    #allocation3 [shape = 's32[2]{0}', space=sflag, size = 0x8, scoped, tag = 'scoped memory for _patch_merging_impl.1']
    %8 = vsyncpa [#allocation3], 0
    %s9 = scalar_lea.sflag [#allocation3], 1
    %10 = vsyncpa %s9, 0
    loop: start=0, step=1, limit=4
    $region2: #{_patch_merging_impl.1} parent=1 // loop_pre_header
      _
    $region3: #{_patch_merging_impl.1} parent=1 // loop_header
      %s12 = sphi 0, %s16
      %p13 = scmp.ge.s32.totalorder %s12, 4
      %s22 = sphi 0, %s24
      %s25 = sphi 0, %s22
      %s26 = sphi 0, %s25
      %s42 = sphi 0, %s26
      %s46 = sphi 0, %s46
      %s48 = sphi 0, %s46
      %s49 = sphi 0, %s48
      %s63 = sphi 0, %s49
      %s67 = sphi 0, %s67
      %s69 = sphi 0, %s67
      %s70 = sphi 0, %s69
      %s84 = sphi 0, %s70
      %s90 = sphi 0, %s92
      %s93 = sphi 0, %s90
      %s94 = sphi 0, %s93
      %s110 = sphi 0, %s94
    $region4: #{_patch_merging_impl.1} parent=1 // loop_header_branch
      %15 = sbr.rel (%p13) target = $region8
    $region5: #{_patch_merging_impl.1} parent=1 // loop_body
      %s17 = ssub.s32 %s12, 1
      %s18 = ssub.s32 %s12, 2
      %s19 = sadd.s32 %s12, 1
      %s20 = ssub.s32 %s12, %s19
      %p21 = scmp.eq.s32.totalorder %s20, 0
      %s23 = sadd.s32 %s22, 1
      %s24 = scalar_select %p21, %s22, %s23
      %p27 = pneg %p21
      %p28 = scmp.eq.s32.totalorder %s12, 1
      %p29 = por %p27, %p28
      %p30 = scmp.ne.s32.totalorder %s22, %s25
      %p31 = scmp.eq.s32.totalorder %s12, 0
      %p32 = por %p30, %p31
      %p33 = scmp.ne.s32.totalorder %s22, %s25
      %p34 = scmp.eq.s32.totalorder %s17, 1
      %p35 = por %p33, %p34
      %p36 = scmp.ne.s32.totalorder %s25, %s26
      %p37 = scmp.eq.s32.totalorder %s17, 0
      %p38 = por %p36, %p37
      %p39 = scmp.ne.s32.totalorder %s25, %s26
      %p40 = scmp.eq.s32.totalorder %s18, 1
      %p41 = por %p39, %p40
      %p43 = scmp.ne.s32.totalorder %s26, %s42
      %p44 = scmp.eq.s32.totalorder %s18, 0
      %p45 = por %p43, %p44
      %s47 = sadd.s32 %s46, 1
      %p50 = scmp.eq.s32.totalorder %s12, 1
      %p51 = scmp.ne.s32.totalorder %s46, %s48
      %p52 = scmp.eq.s32.totalorder %s12, 0
      %p53 = por %p51, %p52
      %p54 = scmp.ne.s32.totalorder %s46, %s48
      %p55 = scmp.eq.s32.totalorder %s17, 1
      %p56 = por %p54, %p55
      %p57 = scmp.ne.s32.totalorder %s48, %s49
      %p58 = scmp.eq.s32.totalorder %s17, 0
      %p59 = por %p57, %p58
      %p60 = scmp.ne.s32.totalorder %s48, %s49
      %p61 = scmp.eq.s32.totalorder %s18, 1
      %p62 = por %p60, %p61
      %p64 = scmp.ne.s32.totalorder %s49, %s63
      %p65 = scmp.eq.s32.totalorder %s18, 0
      %p66 = por %p64, %p65
      %s68 = sadd.s32 %s67, 1
      %p71 = scmp.eq.s32.totalorder %s12, 1
      %p72 = scmp.ne.s32.totalorder %s67, %s69
      %p73 = scmp.eq.s32.totalorder %s12, 0
      %p74 = por %p72, %p73
      %p75 = scmp.ne.s32.totalorder %s67, %s69
      %p76 = scmp.eq.s32.totalorder %s17, 1
      %p77 = por %p75, %p76
      %p78 = scmp.ne.s32.totalorder %s69, %s70
      %p79 = scmp.eq.s32.totalorder %s17, 0
      %p80 = por %p78, %p79
      %p81 = scmp.ne.s32.totalorder %s69, %s70
      %p82 = scmp.eq.s32.totalorder %s18, 1
      %p83 = por %p81, %p82
      %p85 = scmp.ne.s32.totalorder %s70, %s84
      %p86 = scmp.eq.s32.totalorder %s18, 0
      %p87 = por %p85, %p86
      %s88 = ssub.s32 %s12, %s19
      %p89 = scmp.eq.s32.totalorder %s88, 0
      %s91 = sadd.s32 %s90, 1
      %s92 = scalar_select %p89, %s90, %s91
      %p95 = pneg %p89
      %p96 = scmp.eq.s32.totalorder %s12, 1
      %p97 = por %p95, %p96
      %p98 = scmp.ne.s32.totalorder %s90, %s93
      %p99 = scmp.eq.s32.totalorder %s12, 0
      %p100 = por %p98, %p99
      %p101 = scmp.ne.s32.totalorder %s90, %s93
      %p102 = scmp.eq.s32.totalorder %s17, 1
      %p103 = por %p101, %p102
      %p104 = scmp.ne.s32.totalorder %s93, %s94
      %p105 = scmp.eq.s32.totalorder %s17, 0
      %p106 = por %p104, %p105
      %p107 = scmp.ne.s32.totalorder %s93, %s94
      %p108 = scmp.eq.s32.totalorder %s18, 1
      %p109 = por %p107, %p108
      %p111 = scmp.ne.s32.totalorder %s94, %s110
      %p112 = scmp.eq.s32.totalorder %s18, 0
      %p113 = por %p111, %p112
      %p114 = scmp.le.s32.totalorder 1, %s12
      %p115 = scmp.lt.s32.totalorder %s12, 3
      %p116 = pnand %p114, %p115
      %p117 = pneg %p116
      // Predicated region
      $region9: #{_patch_merging_impl.1} parent=5 // pred_check
        _
      $region10: #{_patch_merging_impl.1} parent=5 // pred_check_branch
        %119 = sbr.rel (%p116) target = $region12
      $region11: #{_patch_merging_impl.1} parent=5 // pred_region
        %s120 = ssub.s32 %s12, 1
        // Predicated region
        $region13: #{_patch_merging_impl.1} parent=11 // pred_check
          %p121 = pneg %p59
        $region14: #{_patch_merging_impl.1} parent=11 // pred_check_branch
          %123 = sbr.rel (%p121) target = $region16
        $region15: #{_patch_merging_impl.1} parent=11 // pred_region
          _
        $region16: #{_patch_merging_impl.1} parent=11 // pred_fallthru
          _
        // Predicated region
        $region17: #{_patch_merging_impl.1} parent=11 // pred_check
          %p124 = pneg %p80
        $region18: #{_patch_merging_impl.1} parent=11 // pred_check_branch
          %126 = sbr.rel (%p124) target = $region20
        $region19: #{_patch_merging_impl.1} parent=11 // pred_region
          _
        $region20: #{_patch_merging_impl.1} parent=11 // pred_fallthru
          _
      $region12: #{_patch_merging_impl.1} parent=5 // pred_fallthru
        _
      %p127 = scmp.lt.s32.totalorder %s12, 2
      // Predicated region
      $region21: #{_patch_merging_impl.1} parent=5 // pred_check
        %p128 = pneg %p127
      $region22: #{_patch_merging_impl.1} parent=5 // pred_check_branch
        %130 = sbr.rel (%p128) target = $region24
      $region23: #{_patch_merging_impl.1} parent=5 // pred_region
        // Predicated region
        $region25: #{_patch_merging_impl.1} parent=23 // pred_check
          %p131 = pneg %p32
        $region26: #{_patch_merging_impl.1} parent=23 // pred_check_branch
          %133 = sbr.rel (%p131) target = $region28
        $region27: #{_patch_merging_impl.1} parent=23 // pred_region
          %s134 = smul.u32 2, %s12
          %p135 = scmp.lt.s32.totalorder %s134, 3
          %s136 = scalar_select %p135, %s134, 3
          %s137 = smul.addr %s136, 4
          %s138 = scalar_lea.vmem %s0, %s137
          %s139 = smul.u32 2, %s12
        $region28: #{_patch_merging_impl.1} parent=23 // pred_fallthru
          _
      $region24: #{_patch_merging_impl.1} parent=5 // pred_fallthru
        _
      %p140 = scmp.le.s32.totalorder 1, %s12
      %p141 = scmp.lt.s32.totalorder %s12, 3
      %p142 = pnand %p140, %p141
      %p143 = pneg %p142
      // Predicated region
      $region29: #{_patch_merging_impl.1} parent=5 // pred_check
        _
      $region30: #{_patch_merging_impl.1} parent=5 // pred_check_branch
        %145 = sbr.rel (%p142) target = $region32
      $region31: #{_patch_merging_impl.1} parent=5 // pred_region
        %s146 = ssub.s32 %s12, 1
        %s147 = smul.u32 2, %s17
        %p148 = scmp.lt.s32.totalorder %s147, 3
        %s149 = scalar_select %p148, %s147, 3
        %s150 = smul.addr %s149, 4
        %s151 = scalar_lea.vmem %s0, %s150
        %p152 = pneg %p38
        %p153 = pneg %p35
        %p154 = pneg %p59
        %p155 = pneg %p56
        %p156 = pneg %p80
        %p157 = pneg %p77
        %p158 = pneg %p106
        %p159 = pneg %p103
        %s160 = sand.u32 %s93, 1
        %s161 = scalar_lea.sflag [#allocation3], %s160
        %s162 = sand.u32 %s93, 1
        %s163 = smul.addr %s162, 16
        %s164 = scalar_lea.vmem [#allocation2], %s163
        %s165 = smul.u32 2, %s17
        %p166 = scmp.lt.s32.totalorder %s165, 3
        %s167 = scalar_select %p166, %s165, 3
        %s168 = smul.addr %s167, 4
        %s169 = scalar_lea.vmem %s0, %s168
        %s170 = smul.u32 2, %s17
        %s171 = smul.u32 2, %s17
        %v173 = vld [vmem:[%s169] sm:$0xf]
        %v174 = vld [vmem:[%s169 + $0x4] sm:$0xf]
        %v175 = vld [vmem:[%s1] sm:$0xf]
        %v176 = vld [vmem:[%s1 + $0x4] sm:$0xf]
        %v177 = vld [vmem:[%s1 + $0x8] sm:$0xf]
        %v178 = vld [vmem:[%s1 + $0xc] sm:$0xf]
        %v179 = vld [vmem:[%s2] sm:$0x1]
        %v181 = vlaneseq
        %v182 = vshrl.u32 %v181, 7
        %v183 = vsub.s32 0, %v182
        %v184 = vrot.slane %v179, %v183
        %v188 = vunpack.c.l.b16 %v173
        %v189 = vunpack.c.l.b16 %v174
        %v190 = vpack.c.b16 %v189, %v188
        %v195 = vunpack.c.l.b16 %v175
        %v196 = vunpack.c.l.b16 %v176
        %v197 = vunpack.c.l.b16 %v177
        %v198 = vunpack.c.l.b16 %v178
        %v199 = vpack.c.b16 %v196, %v195
        %v200 = vpack.c.b16 %v198, %v197
        %vm203 = vcmask 261120
        %v205 = vsel %vm203, %v190, 0
        %207 = vmatprep.subr.bf16.mxu0 0
        %208 = vmatpush1.bf16.msra.mxu0 0
        %209 = vmatprep.subr.bf16.mxu0 0
        %210 = vmatpush1.bf16.msra.mxu0 0
        %211 = vmatprep.subr.bf16.mxu0 0
        %212 = vmatpush1.bf16.msra.mxu0 0
        %213 = vmatprep.subr.bf16.mxu0 0
        %214 = vmatpush1.bf16.msra.mxu0 0
        %215 = vmatprep.subr.bf16.mxu0 0
        %216 = vmatpush1.bf16.msra.mxu0 0
        %217 = vmatprep.subr.bf16.mxu0 0
        %218 = vmatpush1.bf16.msra.mxu0 0
        %219 = vmatprep.subr.bf16.mxu0 0
        %220 = vmatpush1.bf16.msra.mxu0 %v200
        %221 = vmatprep.subr.bf16.mxu0 0
        %222 = vmatpush1.bf16.msra.mxu0 %v199
        %223 = vmatprep.subr.bf16.mxu0 0
        %224 = vmatpush2.bf16.msra.mxu0 0
        %225 = vmatprep.subr.bf16.mxu0 0
        %226 = vmatpush2.bf16.msra.mxu0 0
        %227 = vmatprep.subr.bf16.mxu0 0
        %228 = vmatpush2.bf16.msra.mxu0 0
        %229 = vmatprep.subr.bf16.mxu0 0
        %230 = vmatpush2.bf16.msra.mxu0 0
        %231 = vmatprep.subr.bf16.mxu0 0
        %232 = vmatpush2.bf16.msra.mxu0 0
        %233 = vmatprep.subr.bf16.mxu0 0
        %234 = vmatpush2.bf16.msra.mxu0 0
        %235 = vmatprep.subr.bf16.mxu0 0
        %236 = vmatpush2.bf16.msra.mxu0 0
        %237 = vmatprep.subr.bf16.mxu0 0
        %238 = vmatpush2.bf16.msra.mxu0 0
        %239 = vmatprep.mubr.bf16.mxu0 0
        %240 = vmatmul.mubr.bf16.gmra.mxu0 %v205
        %v241 = vpop.f32.mrf.mxu0
        %v242 = vadd.f32 %v184, %v241
        %v243 = vpop.f32.mrf.mxu0
        %v244 = vpop.f32.mrf.mxu0
        %v245 = vadd.f32 %v184, %v244
        %v246 = vpop.f32.mrf.mxu0
        %247 = vdwg.mxu0
        %248 = vst [vmem:[%s164] sm:$0xff] %v242
        %249 = vst [vmem:[%s164 + $0x8] sm:$0xff] %v245
        %s250 = sand.u32 %s93, 1
        %s251 = scalar_lea.sflag [#allocation3], %s250
        %s252 = sand.u32 %s93, 1
        %s253 = smul.addr %s252, 16
        %s254 = scalar_lea.vmem [#allocation2], %s253
        // Predicated region
        $region33: #{_patch_merging_impl.1} parent=31 // pred_check
          %p255 = pneg %p103
        $region34: #{_patch_merging_impl.1} parent=31 // pred_check_branch
          %257 = sbr.rel (%p255) target = $region36
        $region35: #{_patch_merging_impl.1} parent=31 // pred_region
          %s258 = smul.u32 2, %s17
          %s260 = ssub.s32 256, 256
          %261 = vsyncadd %s251, %s260
          %s262 = smul.addr %s258, 128
          %s263 = scalar_lea.hbm %s3, %s262
          %s264 = sshll.u32 %s254, 4
          %s265 = int_to_ptr.vmem [resolvable:$true] %s264
          %270 = dma.vmem_to_hbm [thread:$0]  %s265, 256, %s263, %s251, 128, 128, 8
        $region36: #{_patch_merging_impl.1} parent=31 // pred_fallthru
          _
      $region32: #{_patch_merging_impl.1} parent=5 // pred_fallthru
        _
      %p271 = scmp.le.s32.totalorder 2, %s12
      // Predicated region
      $region37: #{_patch_merging_impl.1} parent=5 // pred_check
        %p272 = pneg %p271
      $region38: #{_patch_merging_impl.1} parent=5 // pred_check_branch
        %274 = sbr.rel (%p272) target = $region40
      $region39: #{_patch_merging_impl.1} parent=5 // pred_region
        %s275 = ssub.s32 %s12, 2
        // Predicated region
        $region41: #{_patch_merging_impl.1} parent=39 // pred_check
          %p276 = pneg %p109
        $region42: #{_patch_merging_impl.1} parent=39 // pred_check_branch
          %278 = sbr.rel (%p276) target = $region44
        $region43: #{_patch_merging_impl.1} parent=39 // pred_region
          %s279 = sand.u32 %s94, 1
          %s280 = scalar_lea.sflag [#allocation3], %s279
          %s281 = sand.u32 %s94, 1
          %s282 = smul.addr %s281, 16
          %s283 = scalar_lea.vmem [#allocation2], %s282
          %284 = dma.done %s280, 256
        $region44: #{_patch_merging_impl.1} parent=39 // pred_fallthru
          _
      $region40: #{_patch_merging_impl.1} parent=5 // pred_fallthru
        _
    $region6: #{_patch_merging_impl.1} parent=1 // loop_footer
      %s16 = sadd.s32 1, %s12
    $region7: #{_patch_merging_impl.1} parent=1 // loop_footer_branch
      %11 = sbr.rel target = $region3
    $region8: #{_patch_merging_impl.1} parent=1 // loop_exit
      _
    %285 = vsyncpa [#allocation3], 1
    %s286 = scalar_lea.sflag [#allocation3], 1
    %287 = vsyncpa %s286, 1

// kernel: _patch_merging_impl.1
$region0: #{_patch_merging_impl.1}
  #allocation0 [shape = 'u32[]', space=smem, size = 0x4, offset = 0x4, fixed_abs, tag = 'smem constant byte address 0x4 - core index']
  #allocation1 [shape = 'u32[144,128]{1,0:T(1,128)}', space=vmem, size = 0x12000, scoped, tag = 'internal scratch']
  %s0 = inlined_call_operand.vmem [shape: bf16[32,32], index: 0, kind: input, shape index: {}]
  %s1 = inlined_call_operand.vmem [shape: bf16[32,128], index: 1, kind: input, shape index: {}]
  %s2 = inlined_call_operand.vmem [shape: f32[1,128], index: 2, kind: input, shape index: {}]
  %s3 = inlined_call_operand.hbm [shape: f32[32,128], index: 3, kind: output, shape index: {}]
  %s4 = sld [smem:[#allocation0]]
  $region45: #{_patch_merging_impl.1} parent=0
    _
  %s6 = ssub.s32 1, %s4
  %s7 = scalar_select 0, %s6, %s4
  $region1: #{_patch_merging_impl.1} parent=0
    #allocation2 [shape = 'u8[16384]{0}', space=vmem, size = 0x4000, scoped, tag = 'output window, operand 0']
    #allocation3 [shape = 's32[2]{0}', space=sflag, size = 0x8, scoped, tag = 'scoped memory for _patch_merging_impl.1']
    %8 = vsyncpa [#allocation3], 0
    %s9 = scalar_lea.sflag [#allocation3], 1
    %10 = vsyncpa %s9, 0
    loop: start=0, step=1, limit=4
    $region2: #{_patch_merging_impl.1} parent=1 // loop_pre_header
      _
    $region3: #{_patch_merging_impl.1} parent=1 // loop_header
      %s12 = sphi 0, %s16
      %p13 = scmp.ge.s32.totalorder %s12, 4
      %s22 = sphi 0, %s24
      %s25 = sphi 0, %s22
      %s26 = sphi 0, %s25
      %s42 = sphi 0, %s26
      %s46 = sphi 0, %s46
      %s48 = sphi 0, %s46
      %s49 = sphi 0, %s48
      %s63 = sphi 0, %s49
      %s67 = sphi 0, %s67
      %s69 = sphi 0, %s67
      %s70 = sphi 0, %s69
      %s84 = sphi 0, %s70
      %s90 = sphi 0, %s92
      %s93 = sphi 0, %s90
      %s94 = sphi 0, %s93
      %s110 = sphi 0, %s94
    $region4: #{_patch_merging_impl.1} parent=1 // loop_header_branch
      %15 = sbr.rel (%p13) target = $region8
    $region5: #{_patch_merging_impl.1} parent=1 // loop_body
      %s17 = ssub.s32 %s12, 1
      %s18 = ssub.s32 %s12, 2
      %s19 = sadd.s32 %s12, 1
      %s20 = ssub.s32 %s12, %s19
      %p21 = scmp.eq.s32.totalorder %s20, 0
      %s23 = sadd.s32 %s22, 1
      %s24 = scalar_select %p21, %s22, %s23
      %p27 = pneg %p21
      %p28 = scmp.eq.s32.totalorder %s12, 1
      %p29 = por %p27, %p28
      %p30 = scmp.ne.s32.totalorder %s22, %s25
      %p31 = scmp.eq.s32.totalorder %s12, 0
      %p32 = por %p30, %p31
      %p33 = scmp.ne.s32.totalorder %s22, %s25
      %p34 = scmp.eq.s32.totalorder %s17, 1
      %p35 = por %p33, %p34
      %p36 = scmp.ne.s32.totalorder %s25, %s26
      %p37 = scmp.eq.s32.totalorder %s17, 0
      %p38 = por %p36, %p37
      %p39 = scmp.ne.s32.totalorder %s25, %s26
      %p40 = scmp.eq.s32.totalorder %s18, 1
      %p41 = por %p39, %p40
      %p43 = scmp.ne.s32.totalorder %s26, %s42
      %p44 = scmp.eq.s32.totalorder %s18, 0
      %p45 = por %p43, %p44
      %s47 = sadd.s32 %s46, 1
      %p50 = scmp.eq.s32.totalorder %s12, 1
      %p51 = scmp.ne.s32.totalorder %s46, %s48
      %p52 = scmp.eq.s32.totalorder %s12, 0
      %p53 = por %p51, %p52
      %p54 = scmp.ne.s32.totalorder %s46, %s48
      %p55 = scmp.eq.s32.totalorder %s17, 1
      %p56 = por %p54, %p55
      %p57 = scmp.ne.s32.totalorder %s48, %s49
      %p58 = scmp.eq.s32.totalorder %s17, 0
      %p59 = por %p57, %p58
      %p60 = scmp.ne.s32.totalorder %s48, %s49
      %p61 = scmp.eq.s32.totalorder %s18, 1
      %p62 = por %p60, %p61
      %p64 = scmp.ne.s32.totalorder %s49, %s63
      %p65 = scmp.eq.s32.totalorder %s18, 0
      %p66 = por %p64, %p65
      %s68 = sadd.s32 %s67, 1
      %p71 = scmp.eq.s32.totalorder %s12, 1
      %p72 = scmp.ne.s32.totalorder %s67, %s69
      %p73 = scmp.eq.s32.totalorder %s12, 0
      %p74 = por %p72, %p73
      %p75 = scmp.ne.s32.totalorder %s67, %s69
      %p76 = scmp.eq.s32.totalorder %s17, 1
      %p77 = por %p75, %p76
      %p78 = scmp.ne.s32.totalorder %s69, %s70
      %p79 = scmp.eq.s32.totalorder %s17, 0
      %p80 = por %p78, %p79
      %p81 = scmp.ne.s32.totalorder %s69, %s70
      %p82 = scmp.eq.s32.totalorder %s18, 1
      %p83 = por %p81, %p82
      %p85 = scmp.ne.s32.totalorder %s70, %s84
      %p86 = scmp.eq.s32.totalorder %s18, 0
      %p87 = por %p85, %p86
      %s88 = ssub.s32 %s12, %s19
      %p89 = scmp.eq.s32.totalorder %s88, 0
      %s91 = sadd.s32 %s90, 1
      %s92 = scalar_select %p89, %s90, %s91
      %p95 = pneg %p89
      %p96 = scmp.eq.s32.totalorder %s12, 1
      %p97 = por %p95, %p96
      %p98 = scmp.ne.s32.totalorder %s90, %s93
      %p99 = scmp.eq.s32.totalorder %s12, 0
      %p100 = por %p98, %p99
      %p101 = scmp.ne.s32.totalorder %s90, %s93
      %p102 = scmp.eq.s32.totalorder %s17, 1
      %p103 = por %p101, %p102
      %p104 = scmp.ne.s32.totalorder %s93, %s94
      %p105 = scmp.eq.s32.totalorder %s17, 0
      %p106 = por %p104, %p105
      %p107 = scmp.ne.s32.totalorder %s93, %s94
      %p108 = scmp.eq.s32.totalorder %s18, 1
      %p109 = por %p107, %p108
      %p111 = scmp.ne.s32.totalorder %s94, %s110
      %p112 = scmp.eq.s32.totalorder %s18, 0
      %p113 = por %p111, %p112
      %p114 = scmp.le.s32.totalorder 1, %s12
      %p115 = scmp.lt.s32.totalorder %s12, 3
      %p116 = pnand %p114, %p115
      %p117 = pneg %p116
      // Predicated region
      $region9: #{_patch_merging_impl.1} parent=5 // pred_check
        _
      $region10: #{_patch_merging_impl.1} parent=5 // pred_check_branch
        %119 = sbr.rel (%p116) target = $region12
      $region11: #{_patch_merging_impl.1} parent=5 // pred_region
        %s120 = ssub.s32 %s12, 1
        // Predicated region
        $region13: #{_patch_merging_impl.1} parent=11 // pred_check
          %p121 = pneg %p59
        $region14: #{_patch_merging_impl.1} parent=11 // pred_check_branch
          %123 = sbr.rel (%p121) target = $region16
        $region15: #{_patch_merging_impl.1} parent=11 // pred_region
          _
        $region16: #{_patch_merging_impl.1} parent=11 // pred_fallthru
          _
        // Predicated region
        $region17: #{_patch_merging_impl.1} parent=11 // pred_check
          %p124 = pneg %p80
        $region18: #{_patch_merging_impl.1} parent=11 // pred_check_branch
          %126 = sbr.rel (%p124) target = $region20
        $region19: #{_patch_merging_impl.1} parent=11 // pred_region
          _
        $region20: #{_patch_merging_impl.1} parent=11 // pred_fallthru
          _
      $region12: #{_patch_merging_impl.1} parent=5 // pred_fallthru
        _
      %p127 = scmp.lt.s32.totalorder %s12, 2
      // Predicated region
      $region21: #{_patch_merging_impl.1} parent=5 // pred_check
        %p128 = pneg %p127
      $region22: #{_patch_merging_impl.1} parent=5 // pred_check_branch
        %130 = sbr.rel (%p128) target = $region24
      $region23: #{_patch_merging_impl.1} parent=5 // pred_region
        // Predicated region
        $region25: #{_patch_merging_impl.1} parent=23 // pred_check
          %p131 = pneg %p32
        $region26: #{_patch_merging_impl.1} parent=23 // pred_check_branch
          %133 = sbr.rel (%p131) target = $region28
        $region27: #{_patch_merging_impl.1} parent=23 // pred_region
          %s134 = smul.u32 2, %s12
          %p135 = scmp.lt.s32.totalorder %s134, 3
          %s136 = scalar_select %p135, %s134, 3
          %s137 = smul.addr %s136, 4
          %s138 = scalar_lea.vmem %s0, %s137
          %s139 = smul.u32 2, %s12
        $region28: #{_patch_merging_impl.1} parent=23 // pred_fallthru
          _
      $region24: #{_patch_merging_impl.1} parent=5 // pred_fallthru
        _
      %p140 = scmp.le.s32.totalorder 1, %s12
      %p141 = scmp.lt.s32.totalorder %s12, 3
      %p142 = pnand %p140, %p141
      %p143 = pneg %p142
      // Predicated region
      $region29: #{_patch_merging_impl.1} parent=5 // pred_check
        _
      $region30: #{_patch_merging_impl.1} parent=5 // pred_check_branch
        %145 = sbr.rel (%p142) target = $region32
      $region31: #{_patch_merging_impl.1} parent=5 // pred_region
        %s146 = ssub.s32 %s12, 1
        %s147 = smul.u32 2, %s17
        %p148 = scmp.lt.s32.totalorder %s147, 3
        %s149 = scalar_select %p148, %s147, 3
        %s150 = smul.addr %s149, 4
        %s151 = scalar_lea.vmem %s0, %s150
        %p152 = pneg %p38
        %p153 = pneg %p35
        %p154 = pneg %p59
        %p155 = pneg %p56
        %p156 = pneg %p80
        %p157 = pneg %p77
        %p158 = pneg %p106
        %p159 = pneg %p103
        %s160 = sand.u32 %s93, 1
        %s161 = scalar_lea.sflag [#allocation3], %s160
        %s162 = sand.u32 %s93, 1
        %s163 = smul.addr %s162, 16
        %s164 = scalar_lea.vmem [#allocation2], %s163
        %s165 = smul.u32 2, %s17
        %p166 = scmp.lt.s32.totalorder %s165, 3
        %s167 = scalar_select %p166, %s165, 3
        %s168 = smul.addr %s167, 4
        %s169 = scalar_lea.vmem %s0, %s168
        %s170 = smul.u32 2, %s17
        %s171 = smul.u32 2, %s17
        %v173 = vld [vmem:[%s169] sm:$0xf]
        %v174 = vld [vmem:[%s169 + $0x4] sm:$0xf]
        %v175 = vld [vmem:[%s1] sm:$0xf]
        %v176 = vld [vmem:[%s1 + $0x4] sm:$0xf]
        %v177 = vld [vmem:[%s1 + $0x8] sm:$0xf]
        %v178 = vld [vmem:[%s1 + $0xc] sm:$0xf]
        %v179 = vld [vmem:[%s2] sm:$0x1]
        %v181 = vlaneseq
        %v182 = vshrl.u32 %v181, 7
        %v183 = vsub.s32 0, %v182
        %v184 = vrot.slane %v179, %v183
        %v188 = vunpack.c.l.b16 %v173
        %v189 = vunpack.c.l.b16 %v174
        %v190 = vpack.c.b16 %v189, %v188
        %v195 = vunpack.c.l.b16 %v175
        %v196 = vunpack.c.l.b16 %v176
        %v197 = vunpack.c.l.b16 %v177
        %v198 = vunpack.c.l.b16 %v178
        %v199 = vpack.c.b16 %v196, %v195
        %v200 = vpack.c.b16 %v198, %v197
        %vm203 = vcmask 261120
        %v205 = vsel %vm203, %v190, 0
        %207 = vmatprep.subr.bf16.mxu0 0
        %208 = vmatpush1.bf16.msra.mxu0 0
        %209 = vmatprep.subr.bf16.mxu0 0
        %210 = vmatpush1.bf16.msra.mxu0 0
        %211 = vmatprep.subr.bf16.mxu0 0
        %212 = vmatpush1.bf16.msra.mxu0 0
        %213 = vmatprep.subr.bf16.mxu0 0
        %214 = vmatpush1.bf16.msra.mxu0 0
        %215 = vmatprep.subr.bf16.mxu0 0
        %216 = vmatpush1.bf16.msra.mxu0 0
        %217 = vmatprep.subr.bf16.mxu0 0
        %218 = vmatpush1.bf16.msra.mxu0 0
        %219 = vmatprep.subr.bf16.mxu0 0
        %220 = vmatpush1.bf16.msra.mxu0 %v200
        %221 = vmatprep.subr.bf16.mxu0 0
        %222 = vmatpush1.bf16.msra.mxu0 %v199
        %223 = vmatprep.subr.bf16.mxu0 0
        %224 = vmatpush2.bf16.msra.mxu0 0
        %225 = vmatprep.subr.bf16.mxu0 0
        %226 = vmatpush2.bf16.msra.mxu0 0
        %227 = vmatprep.subr.bf16.mxu0 0
        %228 = vmatpush2.bf16.msra.mxu0 0
        %229 = vmatprep.subr.bf16.mxu0 0
        %230 = vmatpush2.bf16.msra.mxu0 0
        %231 = vmatprep.subr.bf16.mxu0 0
        %232 = vmatpush2.bf16.msra.mxu0 0
        %233 = vmatprep.subr.bf16.mxu0 0
        %234 = vmatpush2.bf16.msra.mxu0 0
        %235 = vmatprep.subr.bf16.mxu0 0
        %236 = vmatpush2.bf16.msra.mxu0 0
        %237 = vmatprep.subr.bf16.mxu0 0
        %238 = vmatpush2.bf16.msra.mxu0 0
        %239 = vmatprep.mubr.bf16.mxu0 0
        %240 = vmatmul.mubr.bf16.gmra.mxu0 %v205
        %v241 = vpop.f32.mrf.mxu0
        %v242 = vadd.f32 %v184, %v241
        %v243 = vpop.f32.mrf.mxu0
        %v244 = vpop.f32.mrf.mxu0
        %v245 = vadd.f32 %v184, %v244
        %v246 = vpop.f32.mrf.mxu0
        %247 = vdwg.mxu0
        %248 = vst [vmem:[%s164] sm:$0xff] %v242
        %249 = vst [vmem:[%s164 + $0x8] sm:$0xff] %v245
        %s250 = sand.u32 %s93, 1
        %s251 = scalar_lea.sflag [#allocation3], %s250
        %s252 = sand.u32 %s93, 1
        %s253 = smul.addr %s252, 16
        %s254 = scalar_lea.vmem [#allocation2], %s253
        // Predicated region
        $region33: #{_patch_merging_impl.1} parent=31 // pred_check
          %p255 = pneg %p103
        $region34: #{_patch_merging_impl.1} parent=31 // pred_check_branch
          %257 = sbr.rel (%p255) target = $region36
        $region35: #{_patch_merging_impl.1} parent=31 // pred_region
          %s258 = smul.u32 2, %s17
          %s260 = ssub.s32 256, 256
          %261 = vsyncadd %s251, %s260
          %s262 = smul.addr %s258, 128
          %s263 = scalar_lea.hbm %s3, %s262
          %s264 = sshll.u32 %s254, 4
          %s265 = int_to_ptr.vmem [resolvable:$true] %s264
          %270 = dma.vmem_to_hbm [thread:$0]  %s265, 256, %s263, %s251, 128, 128, 8
        $region36: #{_patch_merging_impl.1} parent=31 // pred_fallthru
          _
      $region32: #{_patch_merging_impl.1} parent=5 // pred_fallthru
        _
      %p271 = scmp.le.s32.totalorder 2, %s12
      // Predicated region
      $region37: #{_patch_merging_impl.1} parent=5 // pred_check
        %p272 = pneg %p271
      $region38: #{_patch_merging_impl.1} parent=5 // pred_check_branch
        %274 = sbr.rel (%p272) target = $region40
      $region39: #{_patch_merging_impl.1} parent=5 // pred_region
        %s275 = ssub.s32 %s12, 2
        // Predicated region
        $region41: #{_patch_merging_impl.1} parent=39 // pred_check
          %p276 = pneg %p109
        $region42: #{_patch_merging_impl.1} parent=39 // pred_check_branch
          %278 = sbr.rel (%p276) target = $region44
        $region43: #{_patch_merging_impl.1} parent=39 // pred_region
          %s279 = sand.u32 %s94, 1
          %s280 = scalar_lea.sflag [#allocation3], %s279
          %s281 = sand.u32 %s94, 1
          %s282 = smul.addr %s281, 16
          %s283 = scalar_lea.vmem [#allocation2], %s282
          %284 = dma.done %s280, 256
        $region44: #{_patch_merging_impl.1} parent=39 // pred_fallthru
          _
      $region40: #{_patch_merging_impl.1} parent=5 // pred_fallthru
        _
    $region6: #{_patch_merging_impl.1} parent=1 // loop_footer
      %s16 = sadd.s32 1, %s12
    $region7: #{_patch_merging_impl.1} parent=1 // loop_footer_branch
      %11 = sbr.rel target = $region3
    $region8: #{_patch_merging_impl.1} parent=1 // loop_exit
      _
    %285 = vsyncpa [#allocation3], 1
    %s286 = scalar_lea.sflag [#allocation3], 1
    %287 = vsyncpa %s286, 1

</llo_original>
